<compile_context>
chip_gen: v6e
topology: v6e:2x2x1
jax: 0.10.0
libtpu: 0.0.40
codegen_flags: <defaults>
</compile_context>

<pallas_src>
import math

import jax
import jax.numpy as jnp
from jax import lax
from jax.experimental import pallas as pl
from jax.experimental.pallas import tpu as pltpu


def _make_attn_kernel(S, B):
    """Returns a kernel closed over static seq length S and batch B."""

    def kernel(x_ref, wp_ref, wo_ref, o_ref):
        xa = x_ref[...]          # ((1+B)*S, H+1)  = [x1; x2_0; x2_1 | 1]
        wp = wp_ref[...]         # (H+1, H)        = [w_proj.T ; b_proj] * sqrt(scale)
        wo = wo_ref[...]         # (H+1, 128)      = [w_out.T ; b_out] zero-padded on lanes

        # Single fused projection GEMM for x1 and every x2 batch (bias + scale folded).
        proj = jnp.dot(xa, wp, preferred_element_type=jnp.float32)   # ((1+B)*S, H)
        proj1 = proj[:S]                                             # (S, H)

        attn_rows = []
        for b in range(B):       # static unroll, B == 2
            lo = (1 + b) * S
            proj2 = proj[lo:lo + S]                                  # (S, H)

            # qk = proj1 @ proj2^T without materializing a transpose.
            qk = lax.dot_general(
                proj1, proj2,
                dimension_numbers=(((1,), (1,)), ((), ())),
                preferred_element_type=jnp.float32,
            )                                                        # (S, S), scale folded in

            # softmax over keys (exact divide; EUP/VPU have plenty of slack here)
            m = jnp.max(qk, axis=-1, keepdims=True)
            e = jnp.exp(qk - m)
            p = e / jnp.sum(e, axis=-1, keepdims=True)

            # TODO(synk): nn.Dropout is identity in eval mode; no RNG dropout applied.

            # Attend over the *augmented* x2 rows: the trailing ones column is
            # preserved (softmax rows sum to 1), which folds the output bias
            # into the final GEMM below.
            x2b = xa[lo:lo + S]                                      # (S, H+1)
            attn_rows.append(
                jnp.dot(p, x2b, preferred_element_type=jnp.float32)  # (S, H+1)
            )

        attn = jnp.concatenate(attn_rows, axis=0)                    # (B*S, H+1)

        # Single fused, lane-dense output projection (bias folded via ones column).
        o_ref[...] = jnp.dot(attn, wo,
                             preferred_element_type=jnp.float32).astype(o_ref.dtype)

    return kernel


def attention_forward(x1, x2, w_proj, b_proj, w_out, b_out, num_heads):
    """x1: (1, S, H), x2: (B, S, H). Returns (B, S, H)."""
    B1, S, H = x1.shape
    B, S2, H2 = x2.shape
    assert B1 == 1 and S2 == S and H2 == H

    scale = math.sqrt(H / num_heads)       # np.sqrt(size / num_heads)
    sqrt_scale = math.sqrt(scale)

    LANES = 128
    Ho = ((H + LANES - 1) // LANES) * LANES    # lane-dense output width (>=128)

    # --- trace-time preprocessing (plain XLA ops, outside the kernel) ---------
    # 1. Stack all activations into one slab and append a ones column.
    x_all = jnp.concatenate([x1.reshape(S, H), x2.reshape(B * S, H)], axis=0)
    x_aug = jnp.concatenate(
        [x_all, jnp.ones((x_all.shape[0], 1), x_all.dtype)], axis=1
    ).astype(jnp.float32)                                            # ((1+B)*S, H+1)

    # 2. Projection params: [W^T ; b] with sqrt(scale) folded (applied to both
    #    proj1 and proj2, so their product carries the full scale).
    wp_aug = (jnp.concatenate([w_proj.T, b_proj.reshape(1, H)], axis=0)
              * sqrt_scale).astype(jnp.float32)                      # (H+1, H)

    # 3. Output params: [W^T ; b], zero-padded to 128 lanes for an unmasked store.
    wo_aug = jnp.concatenate([w_out.T, b_out.reshape(1, H)], axis=0) # (H+1, H)
    wo_aug = jnp.pad(wo_aug, ((0, 0), (0, Ho - H))).astype(jnp.float32)  # (H+1, 128)

    out_pad = pl.pallas_call(
        _make_attn_kernel(S, B),
        out_shape=jax.ShapeDtypeStruct((B * S, Ho), jnp.float32),
        in_specs=[
            pl.BlockSpec(memory_space=pltpu.MemorySpace.VMEM),   # x_aug
            pl.BlockSpec(memory_space=pltpu.MemorySpace.VMEM),   # wp_aug
            pl.BlockSpec(memory_space=pltpu.MemorySpec.VMEM) if False else
            pl.BlockSpec(memory_space=pltpu.MemorySpace.VMEM),   # wo_aug
        ],
        out_specs=pl.BlockSpec(memory_space=pltpu.MemorySpace.VMEM),
    )(x_aug, wp_aug, wo_aug)

    # Strip lane padding and restore (B, S, H).
    return out_pad[:, :H].reshape(B, S, H).astype(x2.dtype)


def _reference(x1, x2, w_proj, b_proj, w_out, b_out, num_heads):
    size = x2.shape[-1]
    scale = math.sqrt(size / num_heads)
    proj1 = x1 @ w_proj.T + b_proj
    proj2 = x2 @ w_proj.T + b_proj
    qk = jnp.matmul(proj1, jnp.swapaxes(proj2, -2, -1)) * scale
    p = jax.nn.softmax(qk, axis=-1)
    out = jnp.matmul(p, x2)
    return out @ w_out.T + b_out


if __name__ == "__main__":
    hidden_size = 8
    num_heads = 4
    seq = 24

    key = jax.random.PRNGKey(0)
    k1, k2, k3, k4, k5, k6 = jax.random.split(key, 6)

    x1 = jax.random.normal(k1, (1, seq, hidden_size), dtype=jnp.float32)
    x2 = jax.random.normal(k2, (2, seq, hidden_size), dtype=jnp.float32)

    # Deterministic "Linear" parameter init (uniform like PyTorch default bound).
    bound = 1.0 / (hidden_size ** 0.5)
    w_proj = jax.random.uniform(k3, (hidden_size, hidden_size), jnp.float32, -bound, bound)
    b_proj = jax.random.uniform(k4, (hidden_size,), jnp.float32, -bound, bound)
    w_out = jax.random.uniform(k5, (hidden_size, hidden_size), jnp.float32, -bound, bound)
    b_out = jax.random.uniform(k6, (hidden_size,), jnp.float32, -bound, bound)

    out = attention_forward(x1, x2, w_proj, b_proj, w_out, b_out, num_heads)
    out = jax.block_until_ready(out)

    ref = _reference(x1, x2, w_proj, b_proj, w_out, b_out, num_heads)
    assert out.shape == (2, seq, hidden_size)
    assert jnp.allclose(out, ref, atol=1e-4, rtol=1e-4)
    print("KERNEL_OK")
</pallas_src>

<mosaic_0001>
module attributes {stable_mosaic.version = 11 : i64} {
  func.func @kernel(%arg0: memref<72x9xf32, #tpu.memory_space<vmem>>, %arg1: memref<9x8xf32, #tpu.memory_space<vmem>>, %arg2: memref<9x128xf32, #tpu.memory_space<vmem>>, %arg3: memref<48x128xf32, #tpu.memory_space<vmem>>) attributes {dimension_semantics = [], scalar_prefetch = 0 : i64, scratch_operands = 0 : i64, tpu.core_type = #tpu.core_type<tc>} {
    %c0 = arith.constant 0 : index
    %c0_0 = arith.constant 0 : index
    %0 = vector.load %arg0[%c0, %c0_0] : memref<72x9xf32, #tpu.memory_space<vmem>>, vector<72x9xf32>
    %c0_1 = arith.constant 0 : index
    %c0_2 = arith.constant 0 : index
    %1 = vector.load %arg1[%c0_1, %c0_2] : memref<9x8xf32, #tpu.memory_space<vmem>>, vector<9x8xf32>
    %c0_3 = arith.constant 0 : index
    %c0_4 = arith.constant 0 : index
    %2 = vector.load %arg2[%c0_3, %c0_4] : memref<9x128xf32, #tpu.memory_space<vmem>>, vector<9x128xf32>
    %cst = arith.constant dense<0.000000e+00> : vector<72x8xf32>
    %3 = tpu.matmul %0, %1, %cst {dimension_numbers = #tpu.dot_dimension_numbers<[1], [0], [0], [1], [0, 0, 1, 1], [], []>} : vector<72x9xf32>, vector<9x8xf32>, vector<72x8xf32> -> vector<72x8xf32>
    %4 = vector.extract_strided_slice %3 {offsets = [0, 0], sizes = [24, 8], strides = [1, 1]} : vector<72x8xf32> to vector<24x8xf32>
    %5 = vector.extract_strided_slice %3 {offsets = [24, 0], sizes = [24, 8], strides = [1, 1]} : vector<72x8xf32> to vector<24x8xf32>
    %cst_5 = arith.constant dense<0.000000e+00> : vector<24x24xf32>
    %6 = tpu.matmul %4, %5, %cst_5 {dimension_numbers = #tpu.dot_dimension_numbers<[1], [1], [0], [0], [0, 0, 1, 0], [], []>} : vector<24x8xf32>, vector<24x8xf32>, vector<24x24xf32> -> vector<24x24xf32>
    %cst_6 = arith.constant dense<0xFF800000> : vector<24xf32>
    %7 = vector.multi_reduction <maximumf>, %6, %cst_6 [1] : vector<24x24xf32> to vector<24xf32>
    %8 = vector.shape_cast %7 : vector<24xf32> to vector<24x1xf32>
    %9 = vector.broadcast %8 : vector<24x1xf32> to vector<24x24xf32>
    %10 = arith.subf %6, %9 : vector<24x24xf32>
    %11 = math.exp %10 : vector<24x24xf32>
    %cst_7 = arith.constant dense<0.000000e+00> : vector<24xf32>
    %12 = vector.multi_reduction <add>, %11, %cst_7 [1] : vector<24x24xf32> to vector<24xf32>
    %13 = vector.shape_cast %12 : vector<24xf32> to vector<24x1xf32>
    %14 = vector.broadcast %13 : vector<24x1xf32> to vector<24x24xf32>
    %15 = arith.divf %11, %14 : vector<24x24xf32>
    %16 = vector.extract_strided_slice %0 {offsets = [24, 0], sizes = [24, 9], strides = [1, 1]} : vector<72x9xf32> to vector<24x9xf32>
    %cst_8 = arith.constant dense<0.000000e+00> : vector<24x9xf32>
    %17 = tpu.matmul %15, %16, %cst_8 {dimension_numbers = #tpu.dot_dimension_numbers<[1], [0], [0], [1], [0, 0, 1, 1], [], []>} : vector<24x24xf32>, vector<24x9xf32>, vector<24x9xf32> -> vector<24x9xf32>
    %18 = vector.extract_strided_slice %3 {offsets = [48, 0], sizes = [24, 8], strides = [1, 1]} : vector<72x8xf32> to vector<24x8xf32>
    %cst_9 = arith.constant dense<0.000000e+00> : vector<24x24xf32>
    %19 = tpu.matmul %4, %18, %cst_9 {dimension_numbers = #tpu.dot_dimension_numbers<[1], [1], [0], [0], [0, 0, 1, 0], [], []>} : vector<24x8xf32>, vector<24x8xf32>, vector<24x24xf32> -> vector<24x24xf32>
    %cst_10 = arith.constant dense<0xFF800000> : vector<24xf32>
    %20 = vector.multi_reduction <maximumf>, %19, %cst_10 [1] : vector<24x24xf32> to vector<24xf32>
    %21 = vector.shape_cast %20 : vector<24xf32> to vector<24x1xf32>
    %22 = vector.broadcast %21 : vector<24x1xf32> to vector<24x24xf32>
    %23 = arith.subf %19, %22 : vector<24x24xf32>
    %24 = math.exp %23 : vector<24x24xf32>
    %cst_11 = arith.constant dense<0.000000e+00> : vector<24xf32>
    %25 = vector.multi_reduction <add>, %24, %cst_11 [1] : vector<24x24xf32> to vector<24xf32>
    %26 = vector.shape_cast %25 : vector<24xf32> to vector<24x1xf32>
    %27 = vector.broadcast %26 : vector<24x1xf32> to vector<24x24xf32>
    %28 = arith.divf %24, %27 : vector<24x24xf32>
    %29 = vector.extract_strided_slice %0 {offsets = [48, 0], sizes = [24, 9], strides = [1, 1]} : vector<72x9xf32> to vector<24x9xf32>
    %cst_12 = arith.constant dense<0.000000e+00> : vector<24x9xf32>
    %30 = tpu.matmul %28, %29, %cst_12 {dimension_numbers = #tpu.dot_dimension_numbers<[1], [0], [0], [1], [0, 0, 1, 1], [], []>} : vector<24x24xf32>, vector<24x9xf32>, vector<24x9xf32> -> vector<24x9xf32>
    %31 = tpu.concatenate %17, %30 in 0 : vector<24x9xf32>, vector<24x9xf32> -> vector<48x9xf32>
    %cst_13 = arith.constant dense<0.000000e+00> : vector<48x128xf32>
    %32 = tpu.matmul %31, %2, %cst_13 {dimension_numbers = #tpu.dot_dimension_numbers<[1], [0], [0], [1], [0, 0, 1, 1], [], []>} : vector<48x9xf32>, vector<9x128xf32>, vector<48x128xf32> -> vector<48x128xf32>
    %c0_14 = arith.constant 0 : index
    %c0_15 = arith.constant 0 : index
    %33 = vector.load %arg3[%c0_14, %c0_15] : memref<48x128xf32, #tpu.memory_space<vmem>>, vector<48x128xf32>
    tpu.vector_store %arg3[%c0_14, %c0_15], %32 {strides = array<i32>} : memref<48x128xf32, #tpu.memory_space<vmem>>, vector<48x128xf32>,
    return
  }
}

</mosaic_0001>

<llo_original>
// kernel: tpu_custom_call.1
$region0: #{tpu_custom_call.1}
  #allocation0 [shape = 'u32[]', space=smem, size = 0x4, offset = 0x4, fixed_abs, tag = 'smem constant byte address 0x4 - core index']
  #allocation1 [shape = 'u32[144,128]{1,0:T(1,128)}', space=vmem, size = 0x12000, scoped, tag = 'internal scratch']
  %s0 = inlined_call_operand.vmem [shape: f32[72,9], index: 0, kind: input, shape index: {}]
  %s1 = inlined_call_operand.vmem [shape: f32[9,8], index: 1, kind: input, shape index: {}]
  %s2 = inlined_call_operand.vmem [shape: f32[9,128], index: 2, kind: input, shape index: {}]
  %s3 = inlined_call_operand.hbm [shape: f32[48,128], index: 3, kind: output, shape index: {}]
  %s4 = sld [smem:[#allocation0]]
  $region22: #{tpu_custom_call.1} parent=0
    _
  %s6 = ssub.s32 1, %s4
  %s7 = scalar_select 0, %s6, %s4
  $region1: #{tpu_custom_call.1} parent=0
    #allocation2 [shape = 'u8[24576]{0}', space=vmem, size = 0x6000, scoped, tag = 'output window, operand 0, single buffered']
    #allocation3 [shape = 's32[1]{0}', space=sflag, size = 0x4, scoped, tag = 'scoped memory for tpu_custom_call.1']
    %8 = vsyncpa [#allocation3], 0
    // Predicated region
    $region2: #{tpu_custom_call.1} parent=1 // pred_check
      _
    $region3: #{tpu_custom_call.1} parent=1 // pred_check_branch
      %10 = sbr.rel (0) target = $region5
    $region4: #{tpu_custom_call.1} parent=1 // pred_region
      _
    $region5: #{tpu_custom_call.1} parent=1 // pred_fallthru
      _
    // Predicated region
    $region6: #{tpu_custom_call.1} parent=1 // pred_check
      _
    $region7: #{tpu_custom_call.1} parent=1 // pred_check_branch
      %12 = sbr.rel (0) target = $region9
    $region8: #{tpu_custom_call.1} parent=1 // pred_region
      _
    $region9: #{tpu_custom_call.1} parent=1 // pred_fallthru
      _
    // Predicated region
    $region10: #{tpu_custom_call.1} parent=1 // pred_check
      _
    $region11: #{tpu_custom_call.1} parent=1 // pred_check_branch
      %14 = sbr.rel (0) target = $region13
    $region12: #{tpu_custom_call.1} parent=1 // pred_region
      _
    $region13: #{tpu_custom_call.1} parent=1 // pred_fallthru
      _
    %v15 = vld [vmem:[%s0] sm:$0xff]
    %v16 = vld [vmem:[%s0 + $0x8] sm:$0xff]
    %v17 = vld [vmem:[%s0 + $0x10] sm:$0xff]
    %v18 = vld [vmem:[%s0 + $0x18] sm:$0xff]
    %v19 = vld [vmem:[%s0 + $0x20] sm:$0xff]
    %v20 = vld [vmem:[%s0 + $0x28] sm:$0xff]
    %v21 = vld [vmem:[%s0 + $0x30] sm:$0xff]
    %v22 = vld [vmem:[%s0 + $0x38] sm:$0xff]
    %v23 = vld [vmem:[%s0 + $0x40] sm:$0xff]
    %v24 = vld [vmem:[%s1] sm:$0xff]
    %v25 = vld [vmem:[%s1 + $0x8] sm:$0x1]
    %v26 = vld [vmem:[%s2] sm:$0xff]
    %v27 = vld [vmem:[%s2 + $0x8] sm:$0x1]
    %vm28 = vcmask 72704
    %v30 = vsel %vm28, %v15, 0
    %v33 = vsel %vm28, %v16, 0
    %v36 = vsel %vm28, %v17, 0
    %v39 = vsel %vm28, %v18, 0
    %v42 = vsel %vm28, %v19, 0
    %v45 = vsel %vm28, %v20, 0
    %v48 = vsel %vm28, %v21, 0
    %v51 = vsel %vm28, %v22, 0
    %v54 = vsel %vm28, %v23, 0
    %vm56 = vcmask 1040384
    %v58 = vsel %vm56, %v25, 0
    %60 = vmatprep.subr.mxu0 0.0
    %61 = vmatpush1.msra.mxu0 0.0
    %62 = vmatprep.subr.mxu0 0.0
    %63 = vmatpush1.msra.mxu0 0.0
    %64 = vmatprep.subr.mxu0 0.0
    %65 = vmatpush1.msra.mxu0 0.0
    %66 = vmatprep.subr.mxu0 0.0
    %67 = vmatpush1.msra.mxu0 0.0
    %68 = vmatprep.subr.mxu0 0.0
    %69 = vmatpush1.msra.mxu0 0.0
    %70 = vmatprep.subr.mxu0 0.0
    %71 = vmatpush1.msra.mxu0 0.0
    %72 = vmatprep.subr.mxu0 0.0
    %73 = vmatpush1.msra.mxu0 0.0
    %74 = vmatprep.subr.mxu0 0.0
    %75 = vmatpush1.msra.mxu0 0.0
    %76 = vmatprep.subr.mxu0 0.0
    %77 = vmatpush1.msra.mxu0 0.0
    %78 = vmatprep.subr.mxu0 0.0
    %79 = vmatpush1.msra.mxu0 0.0
    %80 = vmatprep.subr.mxu0 0.0
    %81 = vmatpush1.msra.mxu0 0.0
    %82 = vmatprep.subr.mxu0 0.0
    %83 = vmatpush1.msra.mxu0 0.0
    %84 = vmatprep.subr.mxu0 0.0
    %85 = vmatpush1.msra.mxu0 0.0
    %86 = vmatprep.subr.mxu0 0.0
    %87 = vmatpush1.msra.mxu0 0.0
    %88 = vmatprep.subr.mxu0 0.0
    %89 = vmatpush1.msra.mxu0 %v58
    %90 = vmatprep.subr.mxu0 0.0
    %91 = vmatpush1.msra.mxu0 %v24
    %92 = vmatprep.subr.mxu0 0.0
    %93 = vmatpush2.msra.mxu0 0.0
    %94 = vmatprep.subr.mxu0 0.0
    %95 = vmatpush2.msra.mxu0 0.0
    %96 = vmatprep.subr.mxu0 0.0
    %97 = vmatpush2.msra.mxu0 0.0
    %98 = vmatprep.subr.mxu0 0.0
    %99 = vmatpush2.msra.mxu0 0.0
    %100 = vmatprep.subr.mxu0 0.0
    %101 = vmatpush2.msra.mxu0 0.0
    %102 = vmatprep.subr.mxu0 0.0
    %103 = vmatpush2.msra.mxu0 0.0
    %104 = vmatprep.subr.mxu0 0.0
    %105 = vmatpush2.msra.mxu0 0.0
    %106 = vmatprep.subr.mxu0 0.0
    %107 = vmatpush2.msra.mxu0 0.0
    %108 = vmatprep.subr.mxu0 0.0
    %109 = vmatpush2.msra.mxu0 0.0
    %110 = vmatprep.subr.mxu0 0.0
    %111 = vmatpush2.msra.mxu0 0.0
    %112 = vmatprep.subr.mxu0 0.0
    %113 = vmatpush2.msra.mxu0 0.0
    %114 = vmatprep.subr.mxu0 0.0
    %115 = vmatpush2.msra.mxu0 0.0
    %116 = vmatprep.subr.mxu0 0.0
    %117 = vmatpush2.msra.mxu0 0.0
    %118 = vmatprep.subr.mxu0 0.0
    %119 = vmatpush2.msra.mxu0 0.0
    %120 = vmatprep.subr.mxu0 0.0
    %121 = vmatpush2.msra.mxu0 0.0
    %122 = vmatprep.subr.mxu0 0.0
    %123 = vmatpush2.msra.mxu0 0.0
    %124 = vmatprep.mubr.f32.mxu0 0.0
    %125 = vmatmul.mubr.f32.gmra.mxu0 %v30
    %v126 = vpop.f32.mrf.mxu0
    %v127 = vadd.f32 0.0, %v126
    %v128 = vpop.f32.mrf.mxu0
    %129 = vmatprep.mubr.f32.mxu0 0.0
    %130 = vmatmul.mubr.f32.gmra.mxu0 %v33
    %v131 = vpop.f32.mrf.mxu0
    %v132 = vadd.f32 0.0, %v131
    %v133 = vpop.f32.mrf.mxu0
    %134 = vmatprep.mubr.f32.mxu0 0.0
    %135 = vmatmul.mubr.f32.gmra.mxu0 %v36
    %v136 = vpop.f32.mrf.mxu0
    %v137 = vadd.f32 0.0, %v136
    %v138 = vpop.f32.mrf.mxu0
    %139 = vmatprep.mubr.f32.mxu0 0.0
    %140 = vmatmul.mubr.f32.gmra.mxu0 %v39
    %v141 = vpop.f32.mrf.mxu0
    %v142 = vadd.f32 0.0, %v141
    %v143 = vpop.f32.mrf.mxu0
    %144 = vmatprep.mubr.f32.mxu0 0.0
    %145 = vmatmul.mubr.f32.gmra.mxu0 %v42
    %v146 = vpop.f32.mrf.mxu0
    %v147 = vadd.f32 0.0, %v146
    %v148 = vpop.f32.mrf.mxu0
    %149 = vmatprep.mubr.f32.mxu0 0.0
    %150 = vmatmul.mubr.f32.gmra.mxu0 %v45
    %v151 = vpop.f32.mrf.mxu0
    %v152 = vadd.f32 0.0, %v151
    %v153 = vpop.f32.mrf.mxu0
    %154 = vmatprep.mubr.f32.mxu0 0.0
    %155 = vmatmul.mubr.f32.gmra.mxu0 %v48
    %v156 = vpop.f32.mrf.mxu0
    %v157 = vadd.f32 0.0, %v156
    %v158 = vpop.f32.mrf.mxu0
    %159 = vmatprep.mubr.f32.mxu0 0.0
    %160 = vmatmul.mubr.f32.gmra.mxu0 %v51
    %v161 = vpop.f32.mrf.mxu0
    %v162 = vadd.f32 0.0, %v161
    %v163 = vpop.f32.mrf.mxu0
    %164 = vmatprep.mubr.f32.mxu0 0.0
    %165 = vmatmul.mubr.f32.gmra.mxu0 %v54
    %v166 = vpop.f32.mrf.mxu0
    %v167 = vadd.f32 0.0, %v166
    %v168 = vpop.f32.mrf.mxu0
    %169 = vdwg.mxu0
    %vm170 = vcmask 64512
    %v172 = vsel %vm170, %v127, 0
    %v175 = vsel %vm170, %v132, 0
    %v178 = vsel %vm170, %v137, 0
    %v181 = vsel %vm170, %v142, 0
    %v184 = vsel %vm170, %v147, 0
    %v187 = vsel %vm170, %v152, 0
    %189 = vmatprep.subr.mxu0 0.0
    %190 = vmatpush1.xpose.msra.mxu0 0.0
    %191 = vmatprep.subr.mxu0 0.0
    %192 = vmatpush1.xpose.msra.mxu0 0.0
    %193 = vmatprep.subr.mxu0 0.0
    %194 = vmatpush1.xpose.msra.mxu0 0.0
    %195 = vmatprep.subr.mxu0 0.0
    %196 = vmatpush1.xpose.msra.mxu0 0.0
    %197 = vmatprep.subr.mxu0 0.0
    %198 = vmatpush1.xpose.msra.mxu0 0.0
    %199 = vmatprep.subr.mxu0 0.0
    %200 = vmatpush1.xpose.msra.mxu0 0.0
    %201 = vmatprep.subr.mxu0 0.0
    %202 = vmatpush1.xpose.msra.mxu0 0.0
    %203 = vmatprep.subr.mxu0 0.0
    %204 = vmatpush1.xpose.msra.mxu0 0.0
    %205 = vmatprep.subr.mxu0 0.0
    %206 = vmatpush1.xpose.msra.mxu0 0.0
    %207 = vmatprep.subr.mxu0 0.0
    %208 = vmatpush1.xpose.msra.mxu0 0.0
    %209 = vmatprep.subr.mxu0 0.0
    %210 = vmatpush1.xpose.msra.mxu0 0.0
    %211 = vmatprep.subr.mxu0 0.0
    %212 = vmatpush1.xpose.msra.mxu0 0.0
    %213 = vmatprep.subr.mxu0 0.0
    %214 = vmatpush1.xpose.msra.mxu0 0.0
    %215 = vmatprep.subr.mxu0 0.0
    %216 = vmatpush1.xpose.msra.mxu0 %v187
    %217 = vmatprep.subr.mxu0 0.0
    %218 = vmatpush1.xpose.msra.mxu0 %v184
    %219 = vmatprep.subr.mxu0 0.0
    %220 = vmatpush1.xpose.msra.mxu0 %v181
    %221 = vmatprep.subr.mxu0 0.0
    %222 = vmatpush2.xpose.msra.mxu0 0.0
    %223 = vmatprep.subr.mxu0 0.0
    %224 = vmatpush2.xpose.msra.mxu0 0.0
    %225 = vmatprep.subr.mxu0 0.0
    %226 = vmatpush2.xpose.msra.mxu0 0.0
    %227 = vmatprep.subr.mxu0 0.0
    %228 = vmatpush2.xpose.msra.mxu0 0.0
    %229 = vmatprep.subr.mxu0 0.0
    %230 = vmatpush2.xpose.msra.mxu0 0.0
    %231 = vmatprep.subr.mxu0 0.0
    %232 = vmatpush2.xpose.msra.mxu0 0.0
    %233 = vmatprep.subr.mxu0 0.0
    %234 = vmatpush2.xpose.msra.mxu0 0.0
    %235 = vmatprep.subr.mxu0 0.0
    %236 = vmatpush2.xpose.msra.mxu0 0.0
    %237 = vmatprep.subr.mxu0 0.0
    %238 = vmatpush2.xpose.msra.mxu0 0.0
    %239 = vmatprep.subr.mxu0 0.0
    %240 = vmatpush2.xpose.msra.mxu0 0.0
    %241 = vmatprep.subr.mxu0 0.0
    %242 = vmatpush2.xpose.msra.mxu0 0.0
    %243 = vmatprep.subr.mxu0 0.0
    %244 = vmatpush2.xpose.msra.mxu0 0.0
    %245 = vmatprep.subr.mxu0 0.0
    %246 = vmatpush2.xpose.msra.mxu0 0.0
    %247 = vmatprep.subr.mxu0 0.0
    %248 = vmatpush2.xpose.msra.mxu0 0.0
    %249 = vmatprep.subr.mxu0 0.0
    %250 = vmatpush2.xpose.msra.mxu0 0.0
    %251 = vmatprep.subr.mxu0 0.0
    %252 = vmatpush2.xpose.msra.mxu0 0.0
    %253 = vmatprep.mubr.f32.mxu0 0.0
    %254 = vmatmul.mubr.f32.gmra.mxu0 %v172
    %v255 = vpop.f32.mrf.mxu0
    %v256 = vadd.f32 0.0, %v255
    %v257 = vpop.f32.mrf.mxu0
    %258 = vmatprep.mubr.f32.mxu0 0.0
    %259 = vmatmul.mubr.f32.gmra.mxu0 %v175
    %v260 = vpop.f32.mrf.mxu0
    %v261 = vadd.f32 0.0, %v260
    %v262 = vpop.f32.mrf.mxu0
    %263 = vmatprep.mubr.f32.mxu0 0.0
    %264 = vmatmul.mubr.f32.gmra.mxu0 %v178
    %v265 = vpop.f32.mrf.mxu0
    %v266 = vadd.f32 0.0, %v265
    %v267 = vpop.f32.mrf.mxu0
    %268 = vdwg.mxu0
    %vm269 = vcmask 195584
    %v270 = vsel %vm269, %v256, -inf
    %271 = vmax.xlane.f32.xlu0 %v270
    %v272 = vpop.xlane.xlu0 %271
    %v273 = vsel %vm269, %v261, -inf
    %274 = vmax.xlane.f32.xlu0 %v273
    %v275 = vpop.xlane.xlu0 %274
    %v276 = vsel %vm269, %v266, -inf
    %277 = vmax.xlane.f32.xlu0 %v276
    %v278 = vpop.xlane.xlu0 %277
    %v279 = vsub.f32 %v256, %v272
    %v280 = vsub.f32 %v261, %v275
    %v281 = vsub.f32 %v266, %v278
    %v282 = vmul.f32 %v279, 1.442695
    %v283 = vpow.pop %v282
    %v284 = vmul.f32 %v280, 1.442695
    %v285 = vpow.pop %v284
    %v286 = vmul.f32 %v281, 1.442695
    %v287 = vpow.pop %v286
    %v288 = vsel %vm269, %v283, 0.0
    %289 = vadd.xlane.f32.xlu0 %v288
    %v290 = vpop.xlane.xlu0 %289
    %v291 = vsel %vm269, %v285, 0.0
    %292 = vadd.xlane.f32.xlu0 %v291
    %v293 = vpop.xlane.xlu0 %292
    %v294 = vsel %vm269, %v287, 0.0
    %295 = vadd.xlane.f32.xlu0 %v294
    %v296 = vpop.xlane.xlu0 %295
    %v297 = vrcp.pop %v290
    %v298 = vmul.f32 %v283, %v297
    %v299 = vrcp.pop %v293
    %v300 = vmul.f32 %v285, %v299
    %v301 = vrcp.pop %v296
    %v302 = vmul.f32 %v287, %v301
    %v304 = vsel %vm269, %v298, 0
    %v307 = vsel %vm269, %v300, 0
    %v310 = vsel %vm269, %v302, 0
    %312 = vmatprep.subr.mxu0 0.0
    %313 = vmatpush1.msra.mxu0 0.0
    %314 = vmatprep.subr.mxu0 0.0
    %315 = vmatpush1.msra.mxu0 0.0
    %316 = vmatprep.subr.mxu0 0.0
    %317 = vmatpush1.msra.mxu0 0.0
    %318 = vmatprep.subr.mxu0 0.0
    %319 = vmatpush1.msra.mxu0 0.0
    %320 = vmatprep.subr.mxu0 0.0
    %321 = vmatpush1.msra.mxu0 0.0
    %322 = vmatprep.subr.mxu0 0.0
    %323 = vmatpush1.msra.mxu0 0.0
    %324 = vmatprep.subr.mxu0 0.0
    %325 = vmatpush1.msra.mxu0 0.0
    %326 = vmatprep.subr.mxu0 0.0
    %327 = vmatpush1.msra.mxu0 0.0
    %328 = vmatprep.subr.mxu0 0.0
    %329 = vmatpush1.msra.mxu0 0.0
    %330 = vmatprep.subr.mxu0 0.0
    %331 = vmatpush1.msra.mxu0 0.0
    %332 = vmatprep.subr.mxu0 0.0
    %333 = vmatpush1.msra.mxu0 0.0
    %334 = vmatprep.subr.mxu0 0.0
    %335 = vmatpush1.msra.mxu0 0.0
    %336 = vmatprep.subr.mxu0 0.0
    %337 = vmatpush1.msra.mxu0 0.0
    %338 = vmatprep.subr.mxu0 0.0
    %339 = vmatpush1.msra.mxu0 %v20
    %340 = vmatprep.subr.mxu0 0.0
    %341 = vmatpush1.msra.mxu0 %v19
    %342 = vmatprep.subr.mxu0 0.0
    %343 = vmatpush1.msra.mxu0 %v18
    %344 = vmatprep.subr.mxu0 0.0
    %345 = vmatpush2.msra.mxu0 0.0
    %346 = vmatprep.subr.mxu0 0.0
    %347 = vmatpush2.msra.mxu0 0.0
    %348 = vmatprep.subr.mxu0 0.0
    %349 = vmatpush2.msra.mxu0 0.0
    %350 = vmatprep.subr.mxu0 0.0
    %351 = vmatpush2.msra.mxu0 0.0
    %352 = vmatprep.subr.mxu0 0.0
    %353 = vmatpush2.msra.mxu0 0.0
    %354 = vmatprep.subr.mxu0 0.0
    %355 = vmatpush2.msra.mxu0 0.0
    %356 = vmatprep.subr.mxu0 0.0
    %357 = vmatpush2.msra.mxu0 0.0
    %358 = vmatprep.subr.mxu0 0.0
    %359 = vmatpush2.msra.mxu0 0.0
    %360 = vmatprep.subr.mxu0 0.0
    %361 = vmatpush2.msra.mxu0 0.0
    %362 = vmatprep.subr.mxu0 0.0
    %363 = vmatpush2.msra.mxu0 0.0
    %364 = vmatprep.subr.mxu0 0.0
    %365 = vmatpush2.msra.mxu0 0.0
    %366 = vmatprep.subr.mxu0 0.0
    %367 = vmatpush2.msra.mxu0 0.0
    %368 = vmatprep.subr.mxu0 0.0
    %369 = vmatpush2.msra.mxu0 0.0
    %370 = vmatprep.subr.mxu0 0.0
    %371 = vmatpush2.msra.mxu0 0.0
    %372 = vmatprep.subr.mxu0 0.0
    %373 = vmatpush2.msra.mxu0 0.0
    %374 = vmatprep.subr.mxu0 0.0
    %375 = vmatpush2.msra.mxu0 0.0
    %376 = vmatprep.mubr.f32.mxu0 0.0
    %377 = vmatmul.mubr.f32.gmra.mxu0 %v304
    %v378 = vpop.f32.mrf.mxu0
    %v379 = vadd.f32 0.0, %v378
    %v380 = vpop.f32.mrf.mxu0
    %381 = vmatprep.mubr.f32.mxu0 0.0
    %382 = vmatmul.mubr.f32.gmra.mxu0 %v307
    %v383 = vpop.f32.mrf.mxu0
    %v384 = vadd.f32 0.0, %v383
    %v385 = vpop.f32.mrf.mxu0
    %386 = vmatprep.mubr.f32.mxu0 0.0
    %387 = vmatmul.mubr.f32.gmra.mxu0 %v310
    %v388 = vpop.f32.mrf.mxu0
    %v389 = vadd.f32 0.0, %v388
    %v390 = vpop.f32.mrf.mxu0
    %391 = vdwg.mxu0
    %v393 = vsel %vm170, %v157, 0
    %v396 = vsel %vm170, %v162, 0
    %v399 = vsel %vm170, %v167, 0
    %401 = vmatprep.subr.mxu0 0.0
    %402 = vmatpush1.xpose.msra.mxu0 0.0
    %403 = vmatprep.subr.mxu0 0.0
    %404 = vmatpush1.xpose.msra.mxu0 0.0
    %405 = vmatprep.subr.mxu0 0.0
    %406 = vmatpush1.xpose.msra.mxu0 0.0
    %407 = vmatprep.subr.mxu0 0.0
    %408 = vmatpush1.xpose.msra.mxu0 0.0
    %409 = vmatprep.subr.mxu0 0.0
    %410 = vmatpush1.xpose.msra.mxu0 0.0
    %411 = vmatprep.subr.mxu0 0.0
    %412 = vmatpush1.xpose.msra.mxu0 0.0
    %413 = vmatprep.subr.mxu0 0.0
    %414 = vmatpush1.xpose.msra.mxu0 0.0
    %415 = vmatprep.subr.mxu0 0.0
    %416 = vmatpush1.xpose.msra.mxu0 0.0
    %417 = vmatprep.subr.mxu0 0.0
    %418 = vmatpush1.xpose.msra.mxu0 0.0
    %419 = vmatprep.subr.mxu0 0.0
    %420 = vmatpush1.xpose.msra.mxu0 0.0
    %421 = vmatprep.subr.mxu0 0.0
    %422 = vmatpush1.xpose.msra.mxu0 0.0
    %423 = vmatprep.subr.mxu0 0.0
    %424 = vmatpush1.xpose.msra.mxu0 0.0
    %425 = vmatprep.subr.mxu0 0.0
    %426 = vmatpush1.xpose.msra.mxu0 0.0
    %427 = vmatprep.subr.mxu0 0.0
    %428 = vmatpush1.xpose.msra.mxu0 %v399
    %429 = vmatprep.subr.mxu0 0.0
    %430 = vmatpush1.xpose.msra.mxu0 %v396
    %431 = vmatprep.subr.mxu0 0.0
    %432 = vmatpush1.xpose.msra.mxu0 %v393
    %433 = vmatprep.subr.mxu0 0.0
    %434 = vmatpush2.xpose.msra.mxu0 0.0
    %435 = vmatprep.subr.mxu0 0.0
    %436 = vmatpush2.xpose.msra.mxu0 0.0
    %437 = vmatprep.subr.mxu0 0.0
    %438 = vmatpush2.xpose.msra.mxu0 0.0
    %439 = vmatprep.subr.mxu0 0.0
    %440 = vmatpush2.xpose.msra.mxu0 0.0
    %441 = vmatprep.subr.mxu0 0.0
    %442 = vmatpush2.xpose.msra.mxu0 0.0
    %443 = vmatprep.subr.mxu0 0.0
    %444 = vmatpush2.xpose.msra.mxu0 0.0
    %445 = vmatprep.subr.mxu0 0.0
    %446 = vmatpush2.xpose.msra.mxu0 0.0
    %447 = vmatprep.subr.mxu0 0.0
    %448 = vmatpush2.xpose.msra.mxu0 0.0
    %449 = vmatprep.subr.mxu0 0.0
    %450 = vmatpush2.xpose.msra.mxu0 0.0
    %451 = vmatprep.subr.mxu0 0.0
    %452 = vmatpush2.xpose.msra.mxu0 0.0
    %453 = vmatprep.subr.mxu0 0.0
    %454 = vmatpush2.xpose.msra.mxu0 0.0
    %455 = vmatprep.subr.mxu0 0.0
    %456 = vmatpush2.xpose.msra.mxu0 0.0
    %457 = vmatprep.subr.mxu0 0.0
    %458 = vmatpush2.xpose.msra.mxu0 0.0
    %459 = vmatprep.subr.mxu0 0.0
    %460 = vmatpush2.xpose.msra.mxu0 0.0
    %461 = vmatprep.subr.mxu0 0.0
    %462 = vmatpush2.xpose.msra.mxu0 0.0
    %463 = vmatprep.subr.mxu0 0.0
    %464 = vmatpush2.xpose.msra.mxu0 0.0
    %465 = vmatprep.mubr.f32.mxu0 0.0
    %466 = vmatmul.mubr.f32.gmra.mxu0 %v172
    %v467 = vpop.f32.mrf.mxu0
    %v468 = vadd.f32 0.0, %v467
    %v469 = vpop.f32.mrf.mxu0
    %470 = vmatprep.mubr.f32.mxu0 0.0
    %471 = vmatmul.mubr.f32.gmra.mxu0 %v175
    %v472 = vpop.f32.mrf.mxu0
    %v473 = vadd.f32 0.0, %v472
    %v474 = vpop.f32.mrf.mxu0
    %475 = vmatprep.mubr.f32.mxu0 0.0
    %476 = vmatmul.mubr.f32.gmra.mxu0 %v178
    %v477 = vpop.f32.mrf.mxu0
    %v478 = vadd.f32 0.0, %v477
    %v479 = vpop.f32.mrf.mxu0
    %480 = vdwg.mxu0
    %v481 = vsel %vm269, %v468, -inf
    %482 = vmax.xlane.f32.xlu0 %v481
    %v483 = vpop.xlane.xlu0 %482
    %v484 = vsel %vm269, %v473, -inf
    %485 = vmax.xlane.f32.xlu0 %v484
    %v486 = vpop.xlane.xlu0 %485
    %v487 = vsel %vm269, %v478, -inf
    %488 = vmax.xlane.f32.xlu0 %v487
    %v489 = vpop.xlane.xlu0 %488
    %v490 = vsub.f32 %v468, %v483
    %v491 = vsub.f32 %v473, %v486
    %v492 = vsub.f32 %v478, %v489
    %v493 = vmul.f32 %v490, 1.442695
    %v494 = vpow.pop %v493
    %v495 = vmul.f32 %v491, 1.442695
    %v496 = vpow.pop %v495
    %v497 = vmul.f32 %v492, 1.442695
    %v498 = vpow.pop %v497
    %v499 = vsel %vm269, %v494, 0.0
    %500 = vadd.xlane.f32.xlu0 %v499
    %v501 = vpop.xlane.xlu0 %500
    %v502 = vsel %vm269, %v496, 0.0
    %503 = vadd.xlane.f32.xlu0 %v502
    %v504 = vpop.xlane.xlu0 %503
    %v505 = vsel %vm269, %v498, 0.0
    %506 = vadd.xlane.f32.xlu0 %v505
    %v507 = vpop.xlane.xlu0 %506
    %v508 = vrcp.pop %v501
    %v509 = vmul.f32 %v494, %v508
    %v510 = vrcp.pop %v504
    %v511 = vmul.f32 %v496, %v510
    %v512 = vrcp.pop %v507
    %v513 = vmul.f32 %v498, %v512
    %v515 = vsel %vm269, %v509, 0
    %v518 = vsel %vm269, %v511, 0
    %v521 = vsel %vm269, %v513, 0
    %523 = vmatprep.subr.mxu0 0.0
    %524 = vmatpush1.msra.mxu0 0.0
    %525 = vmatprep.subr.mxu0 0.0
    %526 = vmatpush1.msra.mxu0 0.0
    %527 = vmatprep.subr.mxu0 0.0
    %528 = vmatpush1.msra.mxu0 0.0
    %529 = vmatprep.subr.mxu0 0.0
    %530 = vmatpush1.msra.mxu0 0.0
    %531 = vmatprep.subr.mxu0 0.0
    %532 = vmatpush1.msra.mxu0 0.0
    %533 = vmatprep.subr.mxu0 0.0
    %534 = vmatpush1.msra.mxu0 0.0
    %535 = vmatprep.subr.mxu0 0.0
    %536 = vmatpush1.msra.mxu0 0.0
    %537 = vmatprep.subr.mxu0 0.0
    %538 = vmatpush1.msra.mxu0 0.0
    %539 = vmatprep.subr.mxu0 0.0
    %540 = vmatpush1.msra.mxu0 0.0
    %541 = vmatprep.subr.mxu0 0.0
    %542 = vmatpush1.msra.mxu0 0.0
    %543 = vmatprep.subr.mxu0 0.0
    %544 = vmatpush1.msra.mxu0 0.0
    %545 = vmatprep.subr.mxu0 0.0
    %546 = vmatpush1.msra.mxu0 0.0
    %547 = vmatprep.subr.mxu0 0.0
    %548 = vmatpush1.msra.mxu0 0.0
    %549 = vmatprep.subr.mxu0 0.0
    %550 = vmatpush1.msra.mxu0 %v23
    %551 = vmatprep.subr.mxu0 0.0
    %552 = vmatpush1.msra.mxu0 %v22
    %553 = vmatprep.subr.mxu0 0.0
    %554 = vmatpush1.msra.mxu0 %v21
    %555 = vmatprep.subr.mxu0 0.0
    %556 = vmatpush2.msra.mxu0 0.0
    %557 = vmatprep.subr.mxu0 0.0
    %558 = vmatpush2.msra.mxu0 0.0
    %559 = vmatprep.subr.mxu0 0.0
    %560 = vmatpush2.msra.mxu0 0.0
    %561 = vmatprep.subr.mxu0 0.0
    %562 = vmatpush2.msra.mxu0 0.0
    %563 = vmatprep.subr.mxu0 0.0
    %564 = vmatpush2.msra.mxu0 0.0
    %565 = vmatprep.subr.mxu0 0.0
    %566 = vmatpush2.msra.mxu0 0.0
    %567 = vmatprep.subr.mxu0 0.0
    %568 = vmatpush2.msra.mxu0 0.0
    %569 = vmatprep.subr.mxu0 0.0
    %570 = vmatpush2.msra.mxu0 0.0
    %571 = vmatprep.subr.mxu0 0.0
    %572 = vmatpush2.msra.mxu0 0.0
    %573 = vmatprep.subr.mxu0 0.0
    %574 = vmatpush2.msra.mxu0 0.0
    %575 = vmatprep.subr.mxu0 0.0
    %576 = vmatpush2.msra.mxu0 0.0
    %577 = vmatprep.subr.mxu0 0.0
    %578 = vmatpush2.msra.mxu0 0.0
    %579 = vmatprep.subr.mxu0 0.0
    %580 = vmatpush2.msra.mxu0 0.0
    %581 = vmatprep.subr.mxu0 0.0
    %582 = vmatpush2.msra.mxu0 0.0
    %583 = vmatprep.subr.mxu0 0.0
    %584 = vmatpush2.msra.mxu0 0.0
    %585 = vmatprep.subr.mxu0 0.0
    %586 = vmatpush2.msra.mxu0 0.0
    %587 = vmatprep.mubr.f32.mxu0 0.0
    %588 = vmatmul.mubr.f32.gmra.mxu0 %v515
    %v589 = vpop.f32.mrf.mxu0
    %v590 = vadd.f32 0.0, %v589
    %v591 = vpop.f32.mrf.mxu0
    %592 = vmatprep.mubr.f32.mxu0 0.0
    %593 = vmatmul.mubr.f32.gmra.mxu0 %v518
    %v594 = vpop.f32.mrf.mxu0
    %v595 = vadd.f32 0.0, %v594
    %v596 = vpop.f32.mrf.mxu0
    %597 = vmatprep.mubr.f32.mxu0 0.0
    %598 = vmatmul.mubr.f32.gmra.mxu0 %v521
    %v599 = vpop.f32.mrf.mxu0
    %v600 = vadd.f32 0.0, %v599
    %v601 = vpop.f32.mrf.mxu0
    %602 = vdwg.mxu0
    %v604 = vsel %vm28, %v379, 0
    %v607 = vsel %vm28, %v384, 0
    %v610 = vsel %vm28, %v389, 0
    %v613 = vsel %vm28, %v590, 0
    %v616 = vsel %vm28, %v595, 0
    %v619 = vsel %vm28, %v600, 0
    %v622 = vsel %vm56, %v27, 0
    %624 = vmatprep.subr.mxu0 0.0
    %625 = vmatpush1.msra.mxu0 0.0
    %626 = vmatprep.subr.mxu0 0.0
    %627 = vmatpush1.msra.mxu0 0.0
    %628 = vmatprep.subr.mxu0 0.0
    %629 = vmatpush1.msra.mxu0 0.0
    %630 = vmatprep.subr.mxu0 0.0
    %631 = vmatpush1.msra.mxu0 0.0
    %632 = vmatprep.subr.mxu0 0.0
    %633 = vmatpush1.msra.mxu0 0.0
    %634 = vmatprep.subr.mxu0 0.0
    %635 = vmatpush1.msra.mxu0 0.0
    %636 = vmatprep.subr.mxu0 0.0
    %637 = vmatpush1.msra.mxu0 0.0
    %638 = vmatprep.subr.mxu0 0.0
    %639 = vmatpush1.msra.mxu0 0.0
    %640 = vmatprep.subr.mxu0 0.0
    %641 = vmatpush1.msra.mxu0 0.0
    %642 = vmatprep.subr.mxu0 0.0
    %643 = vmatpush1.msra.mxu0 0.0
    %644 = vmatprep.subr.mxu0 0.0
    %645 = vmatpush1.msra.mxu0 0.0
    %646 = vmatprep.subr.mxu0 0.0
    %647 = vmatpush1.msra.mxu0 0.0
    %648 = vmatprep.subr.mxu0 0.0
    %649 = vmatpush1.msra.mxu0 0.0
    %650 = vmatprep.subr.mxu0 0.0
    %651 = vmatpush1.msra.mxu0 0.0
    %652 = vmatprep.subr.mxu0 0.0
    %653 = vmatpush1.msra.mxu0 %v622
    %654 = vmatprep.subr.mxu0 0.0
    %655 = vmatpush1.msra.mxu0 %v26
    %656 = vmatprep.subr.mxu0 0.0
    %657 = vmatpush2.msra.mxu0 0.0
    %658 = vmatprep.subr.mxu0 0.0
    %659 = vmatpush2.msra.mxu0 0.0
    %660 = vmatprep.subr.mxu0 0.0
    %661 = vmatpush2.msra.mxu0 0.0
    %662 = vmatprep.subr.mxu0 0.0
    %663 = vmatpush2.msra.mxu0 0.0
    %664 = vmatprep.subr.mxu0 0.0
    %665 = vmatpush2.msra.mxu0 0.0
    %666 = vmatprep.subr.mxu0 0.0
    %667 = vmatpush2.msra.mxu0 0.0
    %668 = vmatprep.subr.mxu0 0.0
    %669 = vmatpush2.msra.mxu0 0.0
    %670 = vmatprep.subr.mxu0 0.0
    %671 = vmatpush2.msra.mxu0 0.0
    %672 = vmatprep.subr.mxu0 0.0
    %673 = vmatpush2.msra.mxu0 0.0
    %674 = vmatprep.subr.mxu0 0.0
    %675 = vmatpush2.msra.mxu0 0.0
    %676 = vmatprep.subr.mxu0 0.0
    %677 = vmatpush2.msra.mxu0 0.0
    %678 = vmatprep.subr.mxu0 0.0
    %679 = vmatpush2.msra.mxu0 0.0
    %680 = vmatprep.subr.mxu0 0.0
    %681 = vmatpush2.msra.mxu0 0.0
    %682 = vmatprep.subr.mxu0 0.0
    %683 = vmatpush2.msra.mxu0 0.0
    %684 = vmatprep.subr.mxu0 0.0
    %685 = vmatpush2.msra.mxu0 0.0
    %686 = vmatprep.subr.mxu0 0.0
    %687 = vmatpush2.msra.mxu0 0.0
    %688 = vmatprep.mubr.f32.mxu0 0.0
    %689 = vmatmul.mubr.f32.gmra.mxu0 %v604
    %v690 = vpop.f32.mrf.mxu0
    %v691 = vadd.f32 0.0, %v690
    %v692 = vpop.f32.mrf.mxu0
    %693 = vmatprep.mubr.f32.mxu0 0.0
    %694 = vmatmul.mubr.f32.gmra.mxu0 %v607
    %v695 = vpop.f32.mrf.mxu0
    %v696 = vadd.f32 0.0, %v695
    %v697 = vpop.f32.mrf.mxu0
    %698 = vmatprep.mubr.f32.mxu0 0.0
    %699 = vmatmul.mubr.f32.gmra.mxu0 %v610
    %v700 = vpop.f32.mrf.mxu0
    %v701 = vadd.f32 0.0, %v700
    %v702 = vpop.f32.mrf.mxu0
    %703 = vmatprep.mubr.f32.mxu0 0.0
    %704 = vmatmul.mubr.f32.gmra.mxu0 %v613
    %v705 = vpop.f32.mrf.mxu0
    %v706 = vadd.f32 0.0, %v705
    %v707 = vpop.f32.mrf.mxu0
    %708 = vmatprep.mubr.f32.mxu0 0.0
    %709 = vmatmul.mubr.f32.gmra.mxu0 %v616
    %v710 = vpop.f32.mrf.mxu0
    %v711 = vadd.f32 0.0, %v710
    %v712 = vpop.f32.mrf.mxu0
    %713 = vmatprep.mubr.f32.mxu0 0.0
    %714 = vmatmul.mubr.f32.gmra.mxu0 %v619
    %v715 = vpop.f32.mrf.mxu0
    %v716 = vadd.f32 0.0, %v715
    %v717 = vpop.f32.mrf.mxu0
    %718 = vdwg.mxu0
    %719 = vst [vmem:[#allocation2] sm:$0xff] %v691
    %720 = vst [vmem:[#allocation2 + $0x8] sm:$0xff] %v696
    %721 = vst [vmem:[#allocation2 + $0x10] sm:$0xff] %v701
    %722 = vst [vmem:[#allocation2 + $0x18] sm:$0xff] %v706
    %723 = vst [vmem:[#allocation2 + $0x20] sm:$0xff] %v711
    %724 = vst [vmem:[#allocation2 + $0x28] sm:$0xff] %v716
    // Predicated region
    $region14: #{tpu_custom_call.1} parent=1 // pred_check
      _
    $region15: #{tpu_custom_call.1} parent=1 // pred_check_branch
      %726 = sbr.rel (0) target = $region17
    $region16: #{tpu_custom_call.1} parent=1 // pred_region
      %s728 = ssub.s32 768, 768
      %729 = vsyncadd [#allocation3], %s728
      %s730 = sshll.u32 [#allocation2], 4
      %s731 = int_to_ptr.vmem [resolvable:$true] %s730
      %736 = dma.vmem_to_hbm [thread:$0]  %s731, 768, %s3, [#allocation3], 128, 128, 8
    $region17: #{tpu_custom_call.1} parent=1 // pred_fallthru
      _
    // Predicated region
    $region18: #{tpu_custom_call.1} parent=1 // pred_check
      _
    $region19: #{tpu_custom_call.1} parent=1 // pred_check_branch
      %738 = sbr.rel (0) target = $region21
    $region20: #{tpu_custom_call.1} parent=1 // pred_region
      %739 = dma.done [#allocation3], 768
    $region21: #{tpu_custom_call.1} parent=1 // pred_fallthru
      _
    %740 = vsyncpa [#allocation3], 1

</llo_original>
